<compile_context>
chip_gen: v6e
topology: v6e:2x2x1
jax: 0.10.0
libtpu: 0.0.40
codegen_flags: <defaults>
</compile_context>

<pallas_src>
import jax
import jax.numpy as jnp
from jax import lax
from jax.experimental import pallas as pl
from jax.experimental.pallas import tpu as pltpu

_MIB = 1024 * 1024


def mlp_kernel(x_ref, w1_ref, b1_ref, w2_ref, b2_ref, o_ref, acc_ref):
    j = pl.program_id(1)

    @pl.when(j == 0)
    def _():
        acc_ref[...] = jnp.zeros_like(acc_ref)

    # fc1 on the MXU (bf16 inputs, f32 accumulation); bias + ReLU on the VPU.
    h = jnp.dot(x_ref[...], w1_ref[...], preferred_element_type=jnp.float32)
    h = jnp.maximum(h + b1_ref[...], 0.0)                    # [TILE_B, TILE_H] f32

    # fc2 partial sum: contract on the minor (H) dim of BOTH operands.  The MXU
    # produces the lane-dense [1, TILE_B] row directly -- no XLU transpose and no
    # extra [TILE_B, H] temporaries.
    acc_ref[...] += lax.dot_general(
        w2_ref[...], h,
        dimension_numbers=(((1,), (1,)), ((), ())),
        preferred_element_type=jnp.float32)

    @pl.when(j == pl.num_programs(1) - 1)
    def _():
        o_ref[...] = (acc_ref[...] + b2_ref[0]).astype(o_ref.dtype)


def _round_up(n, m):
    return ((n + m - 1) // m) * m


def _vmem_capacity_bytes():
    try:
        cap = getattr(pltpu.get_tpu_info(), "vmem_capacity_bytes", None)
        if cap:
            return int(cap)
    except Exception:
        pass
    return 64 * _MIB  # conservative fallback (v7x per-TensorCore VMEM)


def multi_layer_regressor(x, w1, b1, w2, b2, *, max_tile_b=1024):
    """Fused forward pass fc2(relu(fc1(x))).

    x : [B, D] float32
    w1: [D, H]      (transpose of PyTorch fc1.weight [H, D])
    b1: [H]
    w2: [H]         (PyTorch fc2.weight is [1, H])
    b2: scalar
    returns [B, 1] float32
    """
    B, D = x.shape
    H = w1.shape[1]
    h_pad = _round_up(H, 128)

    # ---- generation-aware VMEM budget -------------------------------------
    cap = _vmem_capacity_bytes()
    budget = max(cap - 24 * _MIB, cap // 2)          # ~104 MiB v5e/v6e, ~40 MiB v7x
    vmem_limit = max(cap - 8 * _MIB, cap // 2 + 8 * _MIB)

    # ---- H tiling: weights (double-buffer-counted) within half the budget --
    def weight_bytes(th):
        # w1 (bf16) + b1 (f32) + w2 (f32); the Pallas pipeline double-buffers
        # inputs even when the index_map is constant -> count blocks twice.
        return 2 * (D * th * 2 + th * 4 + th * 4)

    tile_h, nh = h_pad, 1
    while weight_bytes(tile_h) > budget // 2 and tile_h > 128:
        nh += 1
        while h_pad % (nh * 128) != 0:
            nh += 1
        tile_h = h_pad // nh
    num_h = h_pad // tile_h

    # ---- batch tiling -------------------------------------------------------
    def vmem_est(tb, th):
        return (2 * tb * D * 2          # double-buffered bf16 x tiles
                + weight_bytes(th)      # w1 / b1 / w2 blocks
                + tb * th * 4           # fc1 intermediate (f32)
                + 2 * tb * 4            # double-buffered output rows
                + tb * 4)               # fc2 accumulator scratch

    b_aligned = _round_up(B, 8)
    if b_aligned <= 128:
        tile_b = b_aligned              # single tile covering the (padded) batch
    else:
        tile_b = min(max_tile_b, _round_up(B, 128))
        # Prefer >= 2 batch tiles so the "parallel" axis can shard across both
        # TensorCores on v7x (harmless on single-TC v5e/v6e).
        if _round_up(B, 128) >= 256:
            tile_b = min(tile_b, max(128, (_round_up(B, 128) // 2) // 128 * 128))
        while tile_b > 128 and vmem_est(tile_b, tile_h) > budget:
            tile_b = max(128, (tile_b // 2) // 128 * 128)
    b_pad = _round_up(B, tile_b)
    num_b = b_pad // tile_b

    # ---- cast / pad inputs (no zero-padded copy of x along D) ---------------
    x_bf16 = x.astype(jnp.bfloat16)
    if b_pad == B:
        xp = x_bf16
    else:
        xp = jnp.zeros((b_pad, D), jnp.bfloat16).at[:B].set(x_bf16)
    w1p = jnp.zeros((D, h_pad), jnp.bfloat16).at[:, :H].set(w1.astype(jnp.bfloat16))
    b1p = jnp.zeros((1, h_pad), jnp.float32).at[0, :H].set(jnp.reshape(b1, (-1,)))
    w2p = jnp.zeros((1, h_pad), jnp.float32).at[0, :H].set(jnp.reshape(w2, (-1,)))
    b2p = jnp.reshape(jnp.asarray(b2, jnp.float32), (1,))

    cost = pl.CostEstimate(
        flops=2 * b_pad * D * h_pad + 2 * b_pad * h_pad,
        transcendentals=0,
        bytes_accessed=int(xp.size * 2 + w1p.size * 2
                           + (b1p.size + w2p.size + b2p.size) * 4 + b_pad * 4),
    )

    out = pl.pallas_call(
        mlp_kernel,
        out_shape=jax.ShapeDtypeStruct((1, b_pad), jnp.float32),
        grid=(num_b, num_h),
        in_specs=[
            pl.BlockSpec((tile_b, D), lambda i, j: (i, 0)),     # x: streamed
            pl.BlockSpec((D, tile_h), lambda i, j: (0, j)),     # w1: resident when num_h == 1
            pl.BlockSpec((1, tile_h), lambda i, j: (0, j)),     # b1
            pl.BlockSpec((1, tile_h), lambda i, j: (0, j)),     # w2
            pl.BlockSpec(memory_space=pltpu.MemorySpace.SMEM),  # b2: SMEM scalar
        ],
        out_specs=pl.BlockSpec((1, tile_b), lambda i, j: (0, i)),  # lane-dense row
        scratch_shapes=[pltpu.VMEM((1, tile_b), jnp.float32)],     # fc2 accumulator
        compiler_params=pltpu.CompilerParams(
            dimension_semantics=("parallel", "arbitrary"),
            vmem_limit_bytes=int(vmem_limit),
        ),
        cost_estimate=cost,
    )(xp, w1p, b1p, w2p, b2p)

    # [1, B_pad] lane-major slab -> [B, 1] column (cheap layout plumbing in XLA).
    return out.reshape(-1)[:B].reshape(B, 1)


def reference(x, w1, b1, w2, b2):
    h = jnp.maximum(x @ w1 + b1[None, :], 0.0)
    return h @ w2[:, None] + b2


if __name__ == "__main__":
    # Small shapes consistent with the module: Linear(input_dim, hidden_dim),
    # Linear(hidden_dim, 1).
    batch, input_dim, hidden_dim = 8, 16, 32

    key = jax.random.PRNGKey(0)
    kx, k1, kb1, k2, kb2 = jax.random.split(key, 5)

    x = jax.random.normal(kx, (batch, input_dim), dtype=jnp.float32)

    bound1 = 1.0 / (input_dim ** 0.5)
    w1 = jax.random.uniform(k1, (input_dim, hidden_dim), jnp.float32, -bound1, bound1)
    b1 = jax.random.uniform(kb1, (hidden_dim,), jnp.float32, -bound1, bound1)

    bound2 = 1.0 / (hidden_dim ** 0.5)
    w2 = jax.random.uniform(k2, (hidden_dim,), jnp.float32, -bound2, bound2)
    b2 = jax.random.uniform(kb2, (), jnp.float32, -bound2, bound2)

    fwd = jax.jit(multi_layer_regressor)
    out = jax.block_until_ready(fwd(x, w1, b1, w2, b2))

    ref = reference(x, w1, b1, w2, b2)
    assert out.shape == (batch, 1)
    # x / w1 are fed to the MXU in bf16 (f32 accumulation), so the tolerance vs.
    # the pure-f32 reference is loosened.
    assert jnp.allclose(out, ref, atol=5e-2, rtol=5e-2), "mismatch vs reference"

    print("KERNEL_OK")
</pallas_src>

<mosaic_0001>
module attributes {stable_mosaic.version = 11 : i64} {
  func.func @mlp_kernel(%arg0: i32, %arg1: i32, %arg2: memref<8x16xbf16, #tpu.memory_space<vmem>>, %arg3: memref<16x128xbf16, #tpu.memory_space<vmem>>, %arg4: memref<1x128xf32, #tpu.memory_space<vmem>>, %arg5: memref<1x128xf32, #tpu.memory_space<vmem>>, %arg6: memref<1xf32, #tpu.memory_space<smem>>, %arg7: memref<1x8xf32, #tpu.memory_space<vmem>>, %arg8: memref<1x8xf32, #tpu.memory_space<vmem>>) attributes {dimension_semantics = [#tpu.dimension_semantics<parallel>, #tpu.dimension_semantics<arbitrary>], iteration_bounds = array<i64: 1, 1>, scalar_prefetch = 0 : i64, scratch_operands = 1 : i64, tpu.core_type = #tpu.core_type<tc>, window_params = [{transform_indices = @transform_0, window_bounds = array<i64: 8, 16>}, {transform_indices = @transform_1, window_bounds = array<i64: 16, 128>}, {transform_indices = @transform_2, window_bounds = array<i64: 1, 128>}, {transform_indices = @transform_3, window_bounds = array<i64: 1, 128>}, {transform_indices = @transform_4, window_bounds = array<i64: 1>}, {transform_indices = @transform_5, window_bounds = array<i64: 1, 8>}]} {
    %c0_i32 = arith.constant 0 : i32
    %0 = arith.cmpi eq, %arg1, %c0_i32 : i32
    %1 = arith.extui %0 : i1 to i32
    %c0_i32_0 = arith.constant 0 : i32
    %2 = arith.cmpi ne, %1, %c0_i32_0 : i32
    scf.if %2 {
      %cst_16 = arith.constant 0.000000e+00 : f32
      %19 = vector.broadcast %cst_16 : f32 to vector<1x8xf32>
      %c0_17 = arith.constant 0 : index
      %c0_18 = arith.constant 0 : index
      %20 = vector.load %arg8[%c0_17, %c0_18] : memref<1x8xf32, #tpu.memory_space<vmem>>, vector<1x8xf32>
      tpu.vector_store %arg8[%c0_17, %c0_18], %19 {strides = array<i32>} : memref<1x8xf32, #tpu.memory_space<vmem>>, vector<1x8xf32>,
    } else {
    }
    %c0 = arith.constant 0 : index
    %c0_1 = arith.constant 0 : index
    %3 = vector.load %arg2[%c0, %c0_1] : memref<8x16xbf16, #tpu.memory_space<vmem>>, vector<8x16xbf16>
    %c0_2 = arith.constant 0 : index
    %c0_3 = arith.constant 0 : index
    %4 = vector.load %arg3[%c0_2, %c0_3] : memref<16x128xbf16, #tpu.memory_space<vmem>>, vector<16x128xbf16>
    %cst = arith.constant dense<0.000000e+00> : vector<8x128xf32>
    %5 = tpu.matmul %3, %4, %cst {dimension_numbers = #tpu.dot_dimension_numbers<[1], [0], [0], [1], [0, 0, 1, 1], [], []>} : vector<8x16xbf16>, vector<16x128xbf16>, vector<8x128xf32> -> vector<8x128xf32>
    %c0_4 = arith.constant 0 : index
    %c0_5 = arith.constant 0 : index
    %6 = vector.load %arg4[%c0_4, %c0_5] : memref<1x128xf32, #tpu.memory_space<vmem>>, vector<1x128xf32>
    %7 = vector.broadcast %6 : vector<1x128xf32> to vector<8x128xf32>
    %8 = arith.addf %5, %7 : vector<8x128xf32>
    %cst_6 = arith.constant 0.000000e+00 : f32
    %9 = vector.broadcast %cst_6 : f32 to vector<8x128xf32>
    %10 = arith.maximumf %8, %9 : vector<8x128xf32>
    %c0_7 = arith.constant 0 : index
    %c0_8 = arith.constant 0 : index
    %11 = vector.load %arg8[%c0_7, %c0_8] : memref<1x8xf32, #tpu.memory_space<vmem>>, vector<1x8xf32>
    %c0_9 = arith.constant 0 : index
    %c0_10 = arith.constant 0 : index
    %12 = vector.load %arg5[%c0_9, %c0_10] : memref<1x128xf32, #tpu.memory_space<vmem>>, vector<1x128xf32>
    %cst_11 = arith.constant dense<0.000000e+00> : vector<1x8xf32>
    %13 = tpu.matmul %12, %10, %cst_11 {dimension_numbers = #tpu.dot_dimension_numbers<[1], [1], [0], [0], [0, 0, 1, 0], [], []>} : vector<1x128xf32>, vector<8x128xf32>, vector<1x8xf32> -> vector<1x8xf32>
    %14 = arith.addf %11, %13 : vector<1x8xf32>
    %c0_12 = arith.constant 0 : index
    %c0_13 = arith.constant 0 : index
    %15 = vector.load %arg8[%c0_12, %c0_13] : memref<1x8xf32, #tpu.memory_space<vmem>>, vector<1x8xf32>
    tpu.vector_store %arg8[%c0_12, %c0_13], %14 {strides = array<i32>} : memref<1x8xf32, #tpu.memory_space<vmem>>, vector<1x8xf32>,
    %c0_i32_14 = arith.constant 0 : i32
    %16 = arith.cmpi eq, %arg1, %c0_i32_14 : i32
    %17 = arith.extui %16 : i1 to i32
    %c0_i32_15 = arith.constant 0 : i32
    %18 = arith.cmpi ne, %17, %c0_i32_15 : i32
    scf.if %18 {
      %c0_16 = arith.constant 0 : index
      %c0_17 = arith.constant 0 : index
      %19 = vector.load %arg8[%c0_16, %c0_17] : memref<1x8xf32, #tpu.memory_space<vmem>>, vector<1x8xf32>
      %c0_18 = arith.constant 0 : index
      %20 = memref.load %arg6[%c0_18] : memref<1xf32, #tpu.memory_space<smem>>
      %21 = vector.broadcast %20 : f32 to vector<1x8xf32>
      %22 = arith.addf %19, %21 : vector<1x8xf32>
      %c0_19 = arith.constant 0 : index
      %c0_20 = arith.constant 0 : index
      %23 = vector.load %arg7[%c0_19, %c0_20] : memref<1x8xf32, #tpu.memory_space<vmem>>, vector<1x8xf32>
      tpu.vector_store %arg7[%c0_19, %c0_20], %22 {strides = array<i32>} : memref<1x8xf32, #tpu.memory_space<vmem>>, vector<1x8xf32>,
    } else {
    }
    return
  }
  func.func @transform_0(%arg0: i32, %arg1: i32) -> (i32, i32) {
    %c0_i32 = arith.constant 0 : i32
    %c0_i32_0 = arith.constant 0 : i32
    return %arg0, %c0_i32 : i32, i32
  }
  func.func @transform_1(%arg0: i32, %arg1: i32) -> (i32, i32) {
    %c0_i32 = arith.constant 0 : i32
    %c0_i32_0 = arith.constant 0 : i32
    return %c0_i32, %arg1 : i32, i32
  }
  func.func @transform_2(%arg0: i32, %arg1: i32) -> (i32, i32) {
    %c0_i32 = arith.constant 0 : i32
    %c0_i32_0 = arith.constant 0 : i32
    return %c0_i32, %arg1 : i32, i32
  }
  func.func @transform_3(%arg0: i32, %arg1: i32) -> (i32, i32) {
    %c0_i32 = arith.constant 0 : i32
    %c0_i32_0 = arith.constant 0 : i32
    return %c0_i32, %arg1 : i32, i32
  }
  func.func @transform_4(%arg0: i32, %arg1: i32) -> i32 {
    %c0_i32 = arith.constant 0 : i32
    %c0_i32_0 = arith.constant 0 : i32
    return %c0_i32 : i32
  }
  func.func @transform_5(%arg0: i32, %arg1: i32) -> (i32, i32) {
    %c0_i32 = arith.constant 0 : i32
    %c0_i32_0 = arith.constant 0 : i32
    return %c0_i32, %arg0 : i32, i32
  }
}

</mosaic_0001>

<llo_original>
// kernel: multi_layer_regressor.1
$region0: #{multi_layer_regressor.1}
  #allocation0 [shape = 'u32[]', space=smem, size = 0x4, offset = 0x4, fixed_abs, tag = 'smem constant byte address 0x4 - core index']
  #allocation1 [shape = 'u32[144,128]{1,0:T(1,128)}', space=vmem, size = 0x12000, scoped, tag = 'internal scratch']
  #allocation2 [shape = 'f32[1,8]{1,0:T(1,128)}', space=vmem, size = 0x200, scoped, tag = 'scratch operand']
  #allocation3 [shape = 'f32[1]{0:T(128)S(6)}', space=smem, size = 0x200, scoped, tag = 'scoped memory for multi_layer_regressor.1']
  %s0 = inlined_call_operand.vmem [shape: bf16[8,16], index: 0, kind: input, shape index: {}]
  %s1 = inlined_call_operand.vmem [shape: bf16[16,128], index: 1, kind: input, shape index: {}]
  %s2 = inlined_call_operand.vmem [shape: f32[1,128], index: 2, kind: input, shape index: {}]
  %s3 = inlined_call_operand.vmem [shape: f32[1,128], index: 3, kind: input, shape index: {}]
  %s4 = inlined_call_operand.<no memory space> [shape: f32[1], index: 4, kind: input, shape index: {}]
  %s5 = inlined_call_operand.hbm [shape: f32[1,8], index: 5, kind: output, shape index: {}]
  %s6 = sld [smem:[#allocation0]]
  $region38: #{multi_layer_regressor.1} parent=0
    _
  %s8 = ssub.s32 1, %s6
  %s9 = scalar_select 0, %s8, %s6
  %10 = sst [smem:[#allocation3]] %s4
  $region1: #{multi_layer_regressor.1} parent=0
    #allocation4 [shape = 'u8[512]{0}', space=vmem, size = 0x400, scoped, tag = 'output window, operand 0, single buffered']
    #allocation5 [shape = 's32[1]{0}', space=sflag, size = 0x4, scoped, tag = 'scoped memory for multi_layer_regressor.1']
    %11 = vsyncpa [#allocation5], 0
    // Predicated region
    $region2: #{multi_layer_regressor.1} parent=1 // pred_check
      _
    $region3: #{multi_layer_regressor.1} parent=1 // pred_check_branch
      %13 = sbr.rel (0) target = $region5
    $region4: #{multi_layer_regressor.1} parent=1 // pred_region
      _
    $region5: #{multi_layer_regressor.1} parent=1 // pred_fallthru
      _
    // Predicated region
    $region6: #{multi_layer_regressor.1} parent=1 // pred_check
      _
    $region7: #{multi_layer_regressor.1} parent=1 // pred_check_branch
      %15 = sbr.rel (0) target = $region9
    $region8: #{multi_layer_regressor.1} parent=1 // pred_region
      _
    $region9: #{multi_layer_regressor.1} parent=1 // pred_fallthru
      _
    // Predicated region
    $region10: #{multi_layer_regressor.1} parent=1 // pred_check
      _
    $region11: #{multi_layer_regressor.1} parent=1 // pred_check_branch
      %17 = sbr.rel (0) target = $region13
    $region12: #{multi_layer_regressor.1} parent=1 // pred_region
      _
    $region13: #{multi_layer_regressor.1} parent=1 // pred_fallthru
      _
    // Predicated region
    $region14: #{multi_layer_regressor.1} parent=1 // pred_check
      _
    $region15: #{multi_layer_regressor.1} parent=1 // pred_check_branch
      %19 = sbr.rel (0) target = $region17
    $region16: #{multi_layer_regressor.1} parent=1 // pred_region
      _
    $region17: #{multi_layer_regressor.1} parent=1 // pred_fallthru
      _
    // Predicated region
    $region18: #{multi_layer_regressor.1} parent=1 // pred_check
      _
    $region19: #{multi_layer_regressor.1} parent=1 // pred_check_branch
      %21 = sbr.rel (0) target = $region21
    $region20: #{multi_layer_regressor.1} parent=1 // pred_region
      _
    $region21: #{multi_layer_regressor.1} parent=1 // pred_fallthru
      _
    %p23 = scmp.eq.s32.totalorder 0, 0
    // Predicated region
    $region22: #{multi_layer_regressor.1} parent=1 // pred_check
      %p24 = pneg %p23
    $region23: #{multi_layer_regressor.1} parent=1 // pred_check_branch
      %26 = sbr.rel (%p24) target = $region25
    $region24: #{multi_layer_regressor.1} parent=1 // pred_region
      %vm27 = vcmask 57344
      %28 = vst.msk [vmem:[#allocation2] sm:$0x1] %vm27, 0.0
    $region25: #{multi_layer_regressor.1} parent=1 // pred_fallthru
      _
    %v29 = vld [vmem:[%s0] sm:$0xf]
    %v30 = vld [vmem:[%s1] sm:$0xf]
    %v31 = vld [vmem:[%s1 + $0x4] sm:$0xf]
    %v32 = vld [vmem:[%s2] sm:$0x1]
    %v34 = vlaneseq
    %v35 = vshrl.u32 %v34, 7
    %v36 = vsub.s32 0, %v35
    %v37 = vrot.slane %v32, %v36
    %v41 = vunpack.c.l.b16 %v30
    %v42 = vunpack.c.l.b16 %v31
    %v43 = vpack.c.b16 %v42, %v41
    %vm45 = vcmask 130048
    %v47 = vsel %vm45, %v29, 0
    %49 = vmatprep.subr.bf16.mxu0 0
    %50 = vmatpush1.bf16.msra.mxu0 0
    %51 = vmatprep.subr.bf16.mxu0 0
    %52 = vmatpush1.bf16.msra.mxu0 0
    %53 = vmatprep.subr.bf16.mxu0 0
    %54 = vmatpush1.bf16.msra.mxu0 0
    %55 = vmatprep.subr.bf16.mxu0 0
    %56 = vmatpush1.bf16.msra.mxu0 0
    %57 = vmatprep.subr.bf16.mxu0 0
    %58 = vmatpush1.bf16.msra.mxu0 0
    %59 = vmatprep.subr.bf16.mxu0 0
    %60 = vmatpush1.bf16.msra.mxu0 0
    %61 = vmatprep.subr.bf16.mxu0 0
    %62 = vmatpush1.bf16.msra.mxu0 0
    %63 = vmatprep.subr.bf16.mxu0 0
    %64 = vmatpush1.bf16.msra.mxu0 %v43
    %65 = vmatprep.subr.bf16.mxu0 0
    %66 = vmatpush2.bf16.msra.mxu0 0
    %67 = vmatprep.subr.bf16.mxu0 0
    %68 = vmatpush2.bf16.msra.mxu0 0
    %69 = vmatprep.subr.bf16.mxu0 0
    %70 = vmatpush2.bf16.msra.mxu0 0
    %71 = vmatprep.subr.bf16.mxu0 0
    %72 = vmatpush2.bf16.msra.mxu0 0
    %73 = vmatprep.subr.bf16.mxu0 0
    %74 = vmatpush2.bf16.msra.mxu0 0
    %75 = vmatprep.subr.bf16.mxu0 0
    %76 = vmatpush2.bf16.msra.mxu0 0
    %77 = vmatprep.subr.bf16.mxu0 0
    %78 = vmatpush2.bf16.msra.mxu0 0
    %79 = vmatprep.subr.bf16.mxu0 0
    %80 = vmatpush2.bf16.msra.mxu0 0
    %81 = vmatprep.mubr.bf16.mxu0 0
    %82 = vmatmul.mubr.bf16.gmra.mxu0 %v47
    %v83 = vpop.f32.mrf.mxu0
    %v84 = vadd.f32 %v37, %v83
    %v85 = vpop.f32.mrf.mxu0
    %v86 = vpop.f32.mrf.mxu0
    %v87 = vpop.f32.mrf.mxu0
    %88 = vdwg.mxu0
    %v89 = vmax.f32 %v84, 0.0
    %v90 = vld [vmem:[#allocation2] sm:$0x1]
    %v91 = vld [vmem:[%s3] sm:$0x1]
    %92 = vmatprep.subr.mxu0 0.0
    %93 = vmatpush1.xpose.msra.mxu0 0.0
    %94 = vmatprep.subr.mxu0 0.0
    %95 = vmatpush1.xpose.msra.mxu0 0.0
    %96 = vmatprep.subr.mxu0 0.0
    %97 = vmatpush1.xpose.msra.mxu0 0.0
    %98 = vmatprep.subr.mxu0 0.0
    %99 = vmatpush1.xpose.msra.mxu0 0.0
    %100 = vmatprep.subr.mxu0 0.0
    %101 = vmatpush1.xpose.msra.mxu0 0.0
    %102 = vmatprep.subr.mxu0 0.0
    %103 = vmatpush1.xpose.msra.mxu0 0.0
    %104 = vmatprep.subr.mxu0 0.0
    %105 = vmatpush1.xpose.msra.mxu0 0.0
    %106 = vmatprep.subr.mxu0 0.0
    %107 = vmatpush1.xpose.msra.mxu0 0.0
    %108 = vmatprep.subr.mxu0 0.0
    %109 = vmatpush1.xpose.msra.mxu0 0.0
    %110 = vmatprep.subr.mxu0 0.0
    %111 = vmatpush1.xpose.msra.mxu0 0.0
    %112 = vmatprep.subr.mxu0 0.0
    %113 = vmatpush1.xpose.msra.mxu0 0.0
    %114 = vmatprep.subr.mxu0 0.0
    %115 = vmatpush1.xpose.msra.mxu0 0.0
    %116 = vmatprep.subr.mxu0 0.0
    %117 = vmatpush1.xpose.msra.mxu0 0.0
    %118 = vmatprep.subr.mxu0 0.0
    %119 = vmatpush1.xpose.msra.mxu0 0.0
    %120 = vmatprep.subr.mxu0 0.0
    %121 = vmatpush1.xpose.msra.mxu0 0.0
    %122 = vmatprep.subr.mxu0 0.0
    %123 = vmatpush1.xpose.msra.mxu0 %v89
    %124 = vmatprep.subr.mxu0 0.0
    %125 = vmatpush2.xpose.msra.mxu0 0.0
    %126 = vmatprep.subr.mxu0 0.0
    %127 = vmatpush2.xpose.msra.mxu0 0.0
    %128 = vmatprep.subr.mxu0 0.0
    %129 = vmatpush2.xpose.msra.mxu0 0.0
    %130 = vmatprep.subr.mxu0 0.0
    %131 = vmatpush2.xpose.msra.mxu0 0.0
    %132 = vmatprep.subr.mxu0 0.0
    %133 = vmatpush2.xpose.msra.mxu0 0.0
    %134 = vmatprep.subr.mxu0 0.0
    %135 = vmatpush2.xpose.msra.mxu0 0.0
    %136 = vmatprep.subr.mxu0 0.0
    %137 = vmatpush2.xpose.msra.mxu0 0.0
    %138 = vmatprep.subr.mxu0 0.0
    %139 = vmatpush2.xpose.msra.mxu0 0.0
    %140 = vmatprep.subr.mxu0 0.0
    %141 = vmatpush2.xpose.msra.mxu0 0.0
    %142 = vmatprep.subr.mxu0 0.0
    %143 = vmatpush2.xpose.msra.mxu0 0.0
    %144 = vmatprep.subr.mxu0 0.0
    %145 = vmatpush2.xpose.msra.mxu0 0.0
    %146 = vmatprep.subr.mxu0 0.0
    %147 = vmatpush2.xpose.msra.mxu0 0.0
    %148 = vmatprep.subr.mxu0 0.0
    %149 = vmatpush2.xpose.msra.mxu0 0.0
    %150 = vmatprep.subr.mxu0 0.0
    %151 = vmatpush2.xpose.msra.mxu0 0.0
    %152 = vmatprep.subr.mxu0 0.0
    %153 = vmatpush2.xpose.msra.mxu0 0.0
    %154 = vmatprep.subr.mxu0 0.0
    %155 = vmatpush2.xpose.msra.mxu0 0.0
    %156 = vmatprep.mubr.f32.mxu0 0.0
    %157 = vmatmul.mubr.f32.gmra.mxu0 %v91
    %v158 = vpop.f32.mrf.mxu0
    %v159 = vadd.f32 0.0, %v158
    %v160 = vpop.f32.mrf.mxu0
    %161 = vdwg.mxu0
    %v162 = vadd.f32 %v90, %v159
    %vm163 = vcmask 57344
    %164 = vst.msk [vmem:[#allocation2] sm:$0x1] %vm163, %v162
    // Predicated region
    $region26: #{multi_layer_regressor.1} parent=1 // pred_check
      %p165 = pneg %p23
    $region27: #{multi_layer_regressor.1} parent=1 // pred_check_branch
      %167 = sbr.rel (%p165) target = $region29
    $region28: #{multi_layer_regressor.1} parent=1 // pred_region
      %v168 = vld [vmem:[#allocation2] sm:$0x1]
      %s169 = sld [smem:[#allocation3]]
      %v170 = vstv %s169
      %v171 = vadd.f32 %v168, %v170
      %172 = vst.msk [vmem:[#allocation4] sm:$0x1] %vm163, %v171
    $region29: #{multi_layer_regressor.1} parent=1 // pred_fallthru
      _
    // Predicated region
    $region30: #{multi_layer_regressor.1} parent=1 // pred_check
      _
    $region31: #{multi_layer_regressor.1} parent=1 // pred_check_branch
      %174 = sbr.rel (0) target = $region33
    $region32: #{multi_layer_regressor.1} parent=1 // pred_region
      %s176 = ssub.s32 16, 16
      %177 = vsyncadd [#allocation5], %s176
      %s179 = sshll.u32 [#allocation4], 4
      %s180 = int_to_ptr.vmem [resolvable:$true] %s179
      %182 = dma.vmem_to_hbm [thread:$0]  %s180, 16, %s5, [#allocation5]
    $region33: #{multi_layer_regressor.1} parent=1 // pred_fallthru
      _
    // Predicated region
    $region34: #{multi_layer_regressor.1} parent=1 // pred_check
      _
    $region35: #{multi_layer_regressor.1} parent=1 // pred_check_branch
      %184 = sbr.rel (0) target = $region37
    $region36: #{multi_layer_regressor.1} parent=1 // pred_region
      %185 = dma.done [#allocation5], 16
    $region37: #{multi_layer_regressor.1} parent=1 // pred_fallthru
      _
    %186 = vsyncpa [#allocation5], 1

</llo_original>
